<compile_context>
chip_gen: v7x
topology: tpu7x:2x2x1
jax: 0.10.0
libtpu: 0.0.40
codegen_flags: <defaults>
</compile_context>

<pallas_src>
import jax
import jax.numpy as jnp
from jax.experimental import pallas as pl
from jax.experimental.pallas import tpu as pltpu


def _round_up(x, m):
    return (x + m - 1) // m * m


def _pick_tile_n(n_pad, max_tile=2048):
    """Largest lane-aligned tile that divides the (128-aligned) padded out_dim."""
    for cand in (2048, 1024, 512, 256, 128):
        if cand <= max_tile and n_pad % cand == 0:
            return cand
    return 128


def decoder_kernel(z_ref, w1_ref, b1_ref, w2_ref, b2_ref, o_ref):
    # Layer 1 (recomputed per output tile -- a few hundred FLOPs, cheaper than
    # carrying scratch state and keeps the grid axis purely 'parallel').
    z = z_ref[...]                                   # (B_pad, L)      f32
    w1 = w1_ref[...].astype(jnp.float32)             # (L, F_pad)      bf16 -> f32 (exact)
    h = jnp.dot(z, w1, preferred_element_type=jnp.float32)
    h = jnp.maximum(h + b1_ref[...], 0.0)            # (B_pad, F_pad)

    # Layer 2 on the current output tile + sigmoid epilogue (all f32).
    w2 = w2_ref[...].astype(jnp.float32)             # (F_pad, TILE_N) bf16 -> f32 (exact)
    y = jnp.dot(h, w2, preferred_element_type=jnp.float32)
    y = y + b2_ref[...]                              # (B_pad, TILE_N) + (1, TILE_N)
    o_ref[...] = jax.nn.sigmoid(y)


def decoder_forward(z, w1, b1, w2, b2, height, width, *, max_tile_n=2048):
    """z: (B, latent) f32; w1: (latent, F) bf16; b1: (1, F) f32;
    w2: (F, 3*H*W) bf16; b2: (1, 3*H*W) f32. Returns (B, 3, H, W) f32."""
    B, L = z.shape
    F = w1.shape[1]
    out_dim = 3 * height * width

    # Hardware-friendly padded sizes (exact math -- see module docstring).
    B_pad = _round_up(max(B, 8), 8)       # sublane-dense loads/stores
    F_pad = _round_up(F, 128)             # lane-dense h, full-depth MXU K
    N_pad = _round_up(out_dim, 128)       # lane-dense (unmasked) output stores
    tile_n = _pick_tile_n(N_pad, max_tile_n)

    zp = jnp.zeros((B_pad, L), jnp.float32).at[:B, :].set(z)
    w1p = jnp.zeros((L, F_pad), w1.dtype).at[:, :F].set(w1)
    b1p = jnp.zeros((1, F_pad), jnp.float32).at[:, :F].set(b1.reshape(1, -1))
    w2p = jnp.zeros((F_pad, N_pad), w2.dtype).at[:F, :out_dim].set(w2)
    b2p = jnp.zeros((1, N_pad), jnp.float32).at[:, :out_dim].set(b2.reshape(1, -1))

    grid = (N_pad // tile_n,)

    cost = pl.CostEstimate(
        flops=2 * B_pad * (L * F_pad + F_pad * N_pad),
        transcendentals=B_pad * N_pad,                       # sigmoid exp
        bytes_accessed=(zp.size * 4 + b1p.size * 4 + b2p.size * 4
                        + w1p.size * w1p.dtype.itemsize
                        + w2p.size * w2p.dtype.itemsize
                        + B_pad * N_pad * 4),
    )

    out_flat = pl.pallas_call(
        decoder_kernel,
        out_shape=jax.ShapeDtypeStruct((B_pad, N_pad), jnp.float32),
        grid=grid,
        in_specs=[
            # Resident operands: same (0, 0) block every step -> fetched once.
            pl.BlockSpec((B_pad, L), lambda n: (0, 0)),        # z
            pl.BlockSpec((L, F_pad), lambda n: (0, 0)),        # W1
            pl.BlockSpec((1, F_pad), lambda n: (0, 0)),        # b1
            # Streamed operands: one lane-dense tile of W2 / b2 per grid step.
            pl.BlockSpec((F_pad, tile_n), lambda n: (0, n)),   # W2 tile
            pl.BlockSpec((1, tile_n), lambda n: (0, n)),       # b2 tile
        ],
        out_specs=pl.BlockSpec((B_pad, tile_n), lambda n: (0, n)),
        compiler_params=pltpu.CompilerParams(
            # Independent output tiles -> shard across v7x's two TensorCores.
            dimension_semantics=("parallel",)),
        cost_estimate=cost,
    )(zp, w1p, b1p, w2p, b2p)

    # Drop padding, then match torch's z.reshape((-1, 3, H, W)).
    return out_flat[:B, :out_dim].reshape(B, 3, height, width)


def init_decoder_params(key, latent_dims, feature_size, height, width):
    """Deterministic init matching nn.Linear shapes (uniform +-1/sqrt(fan_in)).

    Weights are stored transposed vs torch ((in_features, out_features)) and in
    bfloat16 to halve the dominant HBM stream; biases stay f32.
    """
    out_dim = 3 * height * width
    k1, k2, k3, k4 = jax.random.split(key, 4)
    lim1 = 1.0 / jnp.sqrt(latent_dims)
    lim2 = 1.0 / jnp.sqrt(feature_size)
    w1 = jax.random.uniform(k1, (latent_dims, feature_size), jnp.float32,
                            -lim1, lim1).astype(jnp.bfloat16)
    b1 = jax.random.uniform(k2, (1, feature_size), jnp.float32, -lim1, lim1)
    w2 = jax.random.uniform(k3, (feature_size, out_dim), jnp.float32,
                            -lim2, lim2).astype(jnp.bfloat16)
    b2 = jax.random.uniform(k4, (1, out_dim), jnp.float32, -lim2, lim2)
    return w1, b1, w2, b2


if __name__ == "__main__":
    # Small shapes consistent with the module's forward.
    batch = 2
    latent_dims = 8
    feature_size = 32
    height, width = 16, 16

    key = jax.random.PRNGKey(0)
    kz, kp = jax.random.split(key)
    z = jax.random.normal(kz, (batch, latent_dims), dtype=jnp.float32)
    w1, b1, w2, b2 = init_decoder_params(kp, latent_dims, feature_size, height, width)

    out = decoder_forward(z, w1, b1, w2, b2, height, width)
    out = jax.block_until_ready(out)

    # Pure-JAX reference for correctness (same bf16->f32 weight upcast, f32 math).
    w1f = w1.astype(jnp.float32)
    w2f = w2.astype(jnp.float32)
    h_ref = jnp.maximum(z @ w1f + b1, 0.0)
    y_ref = jax.nn.sigmoid(h_ref @ w2f + b2).reshape(batch, 3, height, width)

    assert out.shape == (batch, 3, height, width)
    assert jnp.allclose(out, y_ref, atol=1e-5, rtol=1e-5)

    print("KERNEL_OK")
</pallas_src>

<mosaic_0001>
module attributes {stable_mosaic.version = 11 : i64} {
  func.func @decoder_kernel(%arg0: i32, %arg1: memref<8x8xf32, #tpu.memory_space<vmem>>, %arg2: memref<8x128xbf16, #tpu.memory_space<vmem>>, %arg3: memref<1x128xf32, #tpu.memory_space<vmem>>, %arg4: memref<128x256xbf16, #tpu.memory_space<vmem>>, %arg5: memref<1x256xf32, #tpu.memory_space<vmem>>, %arg6: memref<8x256xf32, #tpu.memory_space<vmem>>) attributes {dimension_semantics = [#tpu.dimension_semantics<parallel>], iteration_bounds = array<i64: 3>, scalar_prefetch = 0 : i64, scratch_operands = 0 : i64, tpu.core_type = #tpu.core_type<tc>, window_params = [{pipeline_mode = #tpu.pipeline_mode<synchronous>, transform_indices = @transform_0, window_bounds = array<i64: 8, 8>}, {pipeline_mode = #tpu.pipeline_mode<synchronous>, transform_indices = @transform_1, window_bounds = array<i64: 8, 128>}, {pipeline_mode = #tpu.pipeline_mode<synchronous>, transform_indices = @transform_2, window_bounds = array<i64: 1, 128>}, {transform_indices = @transform_3, window_bounds = array<i64: 128, 256>}, {transform_indices = @transform_4, window_bounds = array<i64: 1, 256>}, {transform_indices = @transform_5, window_bounds = array<i64: 8, 256>}]} {
    %c0 = arith.constant 0 : index
    %c0_0 = arith.constant 0 : index
    %0 = vector.load %arg1[%c0, %c0_0] : memref<8x8xf32, #tpu.memory_space<vmem>>, vector<8x8xf32>
    %c0_1 = arith.constant 0 : index
    %c0_2 = arith.constant 0 : index
    %1 = vector.load %arg2[%c0_1, %c0_2] : memref<8x128xbf16, #tpu.memory_space<vmem>>, vector<8x128xbf16>
    %2 = arith.extf %1 : vector<8x128xbf16> to vector<8x128xf32>
    %cst = arith.constant dense<0.000000e+00> : vector<8x128xf32>
    %3 = tpu.matmul %0, %2, %cst {dimension_numbers = #tpu.dot_dimension_numbers<[1], [0], [0], [1], [0, 0, 1, 1], [], []>} : vector<8x8xf32>, vector<8x128xf32>, vector<8x128xf32> -> vector<8x128xf32>
    %c0_3 = arith.constant 0 : index
    %c0_4 = arith.constant 0 : index
    %4 = vector.load %arg3[%c0_3, %c0_4] : memref<1x128xf32, #tpu.memory_space<vmem>>, vector<1x128xf32>
    %5 = vector.broadcast %4 : vector<1x128xf32> to vector<8x128xf32>
    %6 = arith.addf %3, %5 : vector<8x128xf32>
    %cst_5 = arith.constant 0.000000e+00 : f32
    %7 = vector.broadcast %cst_5 : f32 to vector<8x128xf32>
    %8 = arith.maximumf %6, %7 : vector<8x128xf32>
    %c0_6 = arith.constant 0 : index
    %c0_7 = arith.constant 0 : index
    %9 = vector.load %arg4[%c0_6, %c0_7] : memref<128x256xbf16, #tpu.memory_space<vmem>>, vector<128x256xbf16>
    %10 = arith.extf %9 : vector<128x256xbf16> to vector<128x256xf32>
    %cst_8 = arith.constant dense<0.000000e+00> : vector<8x256xf32>
    %11 = tpu.matmul %8, %10, %cst_8 {dimension_numbers = #tpu.dot_dimension_numbers<[1], [0], [0], [1], [0, 0, 1, 1], [], []>} : vector<8x128xf32>, vector<128x256xf32>, vector<8x256xf32> -> vector<8x256xf32>
    %c0_9 = arith.constant 0 : index
    %c0_10 = arith.constant 0 : index
    %12 = vector.load %arg5[%c0_9, %c0_10] : memref<1x256xf32, #tpu.memory_space<vmem>>, vector<1x256xf32>
    %13 = vector.broadcast %12 : vector<1x256xf32> to vector<8x256xf32>
    %14 = arith.addf %11, %13 : vector<8x256xf32>
    %15 = arith.negf %14 : vector<8x256xf32>
    %16 = math.exp %15 : vector<8x256xf32>
    %cst_11 = arith.constant 1.000000e+00 : f32
    %17 = vector.broadcast %cst_11 : f32 to vector<8x256xf32>
    %18 = arith.addf %17, %16 : vector<8x256xf32>
    %19 = arith.divf %17, %18 : vector<8x256xf32>
    %c0_12 = arith.constant 0 : index
    %c0_13 = arith.constant 0 : index
    %20 = vector.load %arg6[%c0_12, %c0_13] : memref<8x256xf32, #tpu.memory_space<vmem>>, vector<8x256xf32>
    tpu.vector_store %arg6[%c0_12, %c0_13], %19 {strides = array<i32>} : memref<8x256xf32, #tpu.memory_space<vmem>>, vector<8x256xf32>,
    return
  }
  func.func @transform_0(%arg0: i32) -> (i32, i32) {
    %c0_i32 = arith.constant 0 : i32
    %c0_i32_0 = arith.constant 0 : i32
    %c0_i32_1 = arith.constant 0 : i32
    return %c0_i32, %c0_i32_0 : i32, i32
  }
  func.func @transform_1(%arg0: i32) -> (i32, i32) {
    %c0_i32 = arith.constant 0 : i32
    %c0_i32_0 = arith.constant 0 : i32
    %c0_i32_1 = arith.constant 0 : i32
    return %c0_i32, %c0_i32_0 : i32, i32
  }
  func.func @transform_2(%arg0: i32) -> (i32, i32) {
    %c0_i32 = arith.constant 0 : i32
    %c0_i32_0 = arith.constant 0 : i32
    %c0_i32_1 = arith.constant 0 : i32
    return %c0_i32, %c0_i32_0 : i32, i32
  }
  func.func @transform_3(%arg0: i32) -> (i32, i32) {
    %c0_i32 = arith.constant 0 : i32
    %c0_i32_0 = arith.constant 0 : i32
    return %c0_i32, %arg0 : i32, i32
  }
  func.func @transform_4(%arg0: i32) -> (i32, i32) {
    %c0_i32 = arith.constant 0 : i32
    %c0_i32_0 = arith.constant 0 : i32
    return %c0_i32, %arg0 : i32, i32
  }
  func.func @transform_5(%arg0: i32) -> (i32, i32) {
    %c0_i32 = arith.constant 0 : i32
    %c0_i32_0 = arith.constant 0 : i32
    return %c0_i32, %arg0 : i32, i32
  }
}

</mosaic_0001>

<llo_original>
// kernel: tpu_custom_call.1
$region0: #{tpu_custom_call.1}
  #allocation0 [shape = 'u32[]', space=smem, size = 0x4, offset = 0x4, fixed_abs, tag = 'smem constant byte address 0x4 - core index']
  #allocation1 [shape = 'u32[144,128]{1,0:T(1,128)}', space=vmem, size = 0x12000, scoped, tag = 'internal scratch']
  %s0 = inlined_call_operand.hbm [shape: f32[8,8], index: 0, kind: input, shape index: {}]
  %s1 = inlined_call_operand.hbm [shape: bf16[8,128], index: 1, kind: input, shape index: {}]
  %s2 = inlined_call_operand.vmem [shape: f32[1,128], index: 2, kind: input, shape index: {}]
  %s3 = inlined_call_operand.hbm [shape: bf16[128,768], index: 3, kind: input, shape index: {}]
  %s4 = inlined_call_operand.vmem [shape: f32[1,768], index: 4, kind: input, shape index: {}]
  %s5 = inlined_call_operand.hbm [shape: f32[8,768], index: 5, kind: output, shape index: {}]
  %s6 = sld [smem:[#allocation0]]
  $region65: #{tpu_custom_call.1} parent=0
    _
  %s8 = ssub.s32 1, %s6
  %s9 = scalar_select 0, %s8, %s6
  $region1: #{tpu_custom_call.1} parent=0
    #allocation2 [shape = 'u8[4096]{0}', space=vmem, size = 0x1000, scoped, tag = 'input window, operand 0, single buffered']
    #allocation3 [shape = 's32[2]{0}', space=sflag, size = 0x8, scoped, tag = 'scoped memory for tpu_custom_call.1']
    #allocation4 [shape = 's32[2]{0}', space=sflag, size = 0x8, scoped, tag = 'scoped memory for tpu_custom_call.1']
    #allocation5 [shape = 'u8[2048]{0}', space=vmem, size = 0x800, scoped, tag = 'input window, operand 1, single buffered']
    #allocation6 [shape = 's32[1]{0}', space=sflag, size = 0x4, scoped, tag = 'scoped memory for tpu_custom_call.1']
    #allocation7 [shape = 'u8[131072]{0}', space=vmem, size = 0x20000, scoped, tag = 'input window, operand 3']
    #allocation8 [shape = 'u8[16384]{0}', space=vmem, size = 0x4000, scoped, tag = 'output window, operand 0']
    %10 = vsyncpa [#allocation3], 0
    %11 = vsyncpa [#allocation6], 0
    %12 = vsyncpa [#allocation4], 0
    %s13 = scalar_lea.sflag [#allocation4], 1
    %14 = vsyncpa %s13, 0
    loop: start=0, step=1, limit=5
    $region2: #{tpu_custom_call.1} parent=1 // loop_pre_header
      _
    $region3: #{tpu_custom_call.1} parent=1 // loop_header
      %s16 = sphi 0, %s20
      %p17 = scmp.ge.s32.totalorder %s16, 5
      %s24 = sphi 0, %s24
      %s26 = sphi 0, %s24
      %s27 = sphi 0, %s26
      %s41 = sphi 0, %s27
      %s45 = sphi 0, %s45
      %s47 = sphi 0, %s45
      %s48 = sphi 0, %s47
      %s62 = sphi 0, %s48
      %s66 = sphi 0, %s66
      %s68 = sphi 0, %s66
      %s69 = sphi 0, %s68
      %s83 = sphi 0, %s69
      %s89 = sphi 0, %s91
      %s92 = sphi 0, %s89
      %s93 = sphi 0, %s92
      %s109 = sphi 0, %s93
      %s115 = sphi 0, %s117
      %s118 = sphi 0, %s115
      %s119 = sphi 0, %s118
      %s135 = sphi 0, %s119
      %s141 = sphi 0, %s143
      %s144 = sphi 0, %s141
      %s145 = sphi 0, %s144
      %s161 = sphi 0, %s145
    $region4: #{tpu_custom_call.1} parent=1 // loop_header_branch
      %19 = sbr.rel (%p17) target = $region8
    $region5: #{tpu_custom_call.1} parent=1 // loop_body
      %s21 = ssub.s32 %s16, 1
      %s22 = ssub.s32 %s16, 2
      %s23 = sadd.s32 %s16, 1
      %s25 = sadd.s32 %s24, 1
      %p28 = scmp.eq.s32.totalorder %s16, 2
      %p29 = scmp.ne.s32.totalorder %s24, %s26
      %p30 = scmp.eq.s32.totalorder %s16, 0
      %p31 = por %p29, %p30
      %p32 = scmp.ne.s32.totalorder %s24, %s26
      %p33 = scmp.eq.s32.totalorder %s21, 2
      %p34 = por %p32, %p33
      %p35 = scmp.ne.s32.totalorder %s26, %s27
      %p36 = scmp.eq.s32.totalorder %s21, 0
      %p37 = por %p35, %p36
      %p38 = scmp.ne.s32.totalorder %s26, %s27
      %p39 = scmp.eq.s32.totalorder %s22, 2
      %p40 = por %p38, %p39
      %p42 = scmp.ne.s32.totalorder %s27, %s41
      %p43 = scmp.eq.s32.totalorder %s22, 0
      %p44 = por %p42, %p43
      %s46 = sadd.s32 %s45, 1
      %p49 = scmp.eq.s32.totalorder %s16, 2
      %p50 = scmp.ne.s32.totalorder %s45, %s47
      %p51 = scmp.eq.s32.totalorder %s16, 0
      %p52 = por %p50, %p51
      %p53 = scmp.ne.s32.totalorder %s45, %s47
      %p54 = scmp.eq.s32.totalorder %s21, 2
      %p55 = por %p53, %p54
      %p56 = scmp.ne.s32.totalorder %s47, %s48
      %p57 = scmp.eq.s32.totalorder %s21, 0
      %p58 = por %p56, %p57
      %p59 = scmp.ne.s32.totalorder %s47, %s48
      %p60 = scmp.eq.s32.totalorder %s22, 2
      %p61 = por %p59, %p60
      %p63 = scmp.ne.s32.totalorder %s48, %s62
      %p64 = scmp.eq.s32.totalorder %s22, 0
      %p65 = por %p63, %p64
      %s67 = sadd.s32 %s66, 1
      %p70 = scmp.eq.s32.totalorder %s16, 2
      %p71 = scmp.ne.s32.totalorder %s66, %s68
      %p72 = scmp.eq.s32.totalorder %s16, 0
      %p73 = por %p71, %p72
      %p74 = scmp.ne.s32.totalorder %s66, %s68
      %p75 = scmp.eq.s32.totalorder %s21, 2
      %p76 = por %p74, %p75
      %p77 = scmp.ne.s32.totalorder %s68, %s69
      %p78 = scmp.eq.s32.totalorder %s21, 0
      %p79 = por %p77, %p78
      %p80 = scmp.ne.s32.totalorder %s68, %s69
      %p81 = scmp.eq.s32.totalorder %s22, 2
      %p82 = por %p80, %p81
      %p84 = scmp.ne.s32.totalorder %s69, %s83
      %p85 = scmp.eq.s32.totalorder %s22, 0
      %p86 = por %p84, %p85
      %s87 = ssub.s32 %s16, %s23
      %p88 = scmp.eq.s32.totalorder %s87, 0
      %s90 = sadd.s32 %s89, 1
      %s91 = scalar_select %p88, %s89, %s90
      %p94 = pneg %p88
      %p95 = scmp.eq.s32.totalorder %s16, 2
      %p96 = por %p94, %p95
      %p97 = scmp.ne.s32.totalorder %s89, %s92
      %p98 = scmp.eq.s32.totalorder %s16, 0
      %p99 = por %p97, %p98
      %p100 = scmp.ne.s32.totalorder %s89, %s92
      %p101 = scmp.eq.s32.totalorder %s21, 2
      %p102 = por %p100, %p101
      %p103 = scmp.ne.s32.totalorder %s92, %s93
      %p104 = scmp.eq.s32.totalorder %s21, 0
      %p105 = por %p103, %p104
      %p106 = scmp.ne.s32.totalorder %s92, %s93
      %p107 = scmp.eq.s32.totalorder %s22, 2
      %p108 = por %p106, %p107
      %p110 = scmp.ne.s32.totalorder %s93, %s109
      %p111 = scmp.eq.s32.totalorder %s22, 0
      %p112 = por %p110, %p111
      %s113 = ssub.s32 %s16, %s23
      %p114 = scmp.eq.s32.totalorder %s113, 0
      %s116 = sadd.s32 %s115, 1
      %s117 = scalar_select %p114, %s115, %s116
      %p120 = pneg %p114
      %p121 = scmp.eq.s32.totalorder %s16, 2
      %p122 = por %p120, %p121
      %p123 = scmp.ne.s32.totalorder %s115, %s118
      %p124 = scmp.eq.s32.totalorder %s16, 0
      %p125 = por %p123, %p124
      %p126 = scmp.ne.s32.totalorder %s115, %s118
      %p127 = scmp.eq.s32.totalorder %s21, 2
      %p128 = por %p126, %p127
      %p129 = scmp.ne.s32.totalorder %s118, %s119
      %p130 = scmp.eq.s32.totalorder %s21, 0
      %p131 = por %p129, %p130
      %p132 = scmp.ne.s32.totalorder %s118, %s119
      %p133 = scmp.eq.s32.totalorder %s22, 2
      %p134 = por %p132, %p133
      %p136 = scmp.ne.s32.totalorder %s119, %s135
      %p137 = scmp.eq.s32.totalorder %s22, 0
      %p138 = por %p136, %p137
      %s139 = ssub.s32 %s16, %s23
      %p140 = scmp.eq.s32.totalorder %s139, 0
      %s142 = sadd.s32 %s141, 1
      %s143 = scalar_select %p140, %s141, %s142
      %p146 = pneg %p140
      %p147 = scmp.eq.s32.totalorder %s16, 2
      %p148 = por %p146, %p147
      %p149 = scmp.ne.s32.totalorder %s141, %s144
      %p150 = scmp.eq.s32.totalorder %s16, 0
      %p151 = por %p149, %p150
      %p152 = scmp.ne.s32.totalorder %s141, %s144
      %p153 = scmp.eq.s32.totalorder %s21, 2
      %p154 = por %p152, %p153
      %p155 = scmp.ne.s32.totalorder %s144, %s145
      %p156 = scmp.eq.s32.totalorder %s21, 0
      %p157 = por %p155, %p156
      %p158 = scmp.ne.s32.totalorder %s144, %s145
      %p159 = scmp.eq.s32.totalorder %s22, 2
      %p160 = por %p158, %p159
      %p162 = scmp.ne.s32.totalorder %s145, %s161
      %p163 = scmp.eq.s32.totalorder %s22, 0
      %p164 = por %p162, %p163
      %p165 = scmp.le.s32.totalorder 1, %s16
      %p166 = scmp.lt.s32.totalorder %s16, 4
      %p167 = pnand %p165, %p166
      %p168 = pneg %p167
      // Predicated region
      $region9: #{tpu_custom_call.1} parent=5 // pred_check
        _
      $region10: #{tpu_custom_call.1} parent=5 // pred_check_branch
        %170 = sbr.rel (%p167) target = $region12
      $region11: #{tpu_custom_call.1} parent=5 // pred_region
        %s171 = ssub.s32 %s16, 1
        // Predicated region
        $region13: #{tpu_custom_call.1} parent=11 // pred_check
          %p172 = pneg %p37
        $region14: #{tpu_custom_call.1} parent=11 // pred_check_branch
          %174 = sbr.rel (%p172) target = $region16
        $region15: #{tpu_custom_call.1} parent=11 // pred_region
          %s176 = ssub.s32 128, 128
          %177 = vsyncadd [#allocation3], %s176
          %s179 = sshll.u32 [#allocation2], 4
          %s180 = int_to_ptr.vmem [resolvable:$true] %s179
          %182 = dma.hbm_to_vmem [thread:$0]  %s0, 128, %s180, [#allocation3]
        $region16: #{tpu_custom_call.1} parent=11 // pred_fallthru
          _
        // Predicated region
        $region17: #{tpu_custom_call.1} parent=11 // pred_check
          %p183 = pneg %p58
        $region18: #{tpu_custom_call.1} parent=11 // pred_check_branch
          %185 = sbr.rel (%p183) target = $region20
        $region19: #{tpu_custom_call.1} parent=11 // pred_region
          %s187 = ssub.s32 64, 64
          %188 = vsyncadd [#allocation6], %s187
          %s190 = sshll.u32 [#allocation5], 4
          %s191 = int_to_ptr.vmem [resolvable:$true] %s190
          %193 = dma.hbm_to_vmem [thread:$0]  %s1, 64, %s191, [#allocation6]
        $region20: #{tpu_custom_call.1} parent=11 // pred_fallthru
          _
        // Predicated region
        $region21: #{tpu_custom_call.1} parent=11 // pred_check
          %p194 = pneg %p79
        $region22: #{tpu_custom_call.1} parent=11 // pred_check_branch
          %196 = sbr.rel (%p194) target = $region24
        $region23: #{tpu_custom_call.1} parent=11 // pred_region
          _
        $region24: #{tpu_custom_call.1} parent=11 // pred_fallthru
          _
      $region12: #{tpu_custom_call.1} parent=5 // pred_fallthru
        _
      %p197 = scmp.lt.s32.totalorder %s16, 3
      // Predicated region
      $region25: #{tpu_custom_call.1} parent=5 // pred_check
        %p198 = pneg %p197
      $region26: #{tpu_custom_call.1} parent=5 // pred_check_branch
        %200 = sbr.rel (%p198) target = $region28
      $region27: #{tpu_custom_call.1} parent=5 // pred_region
        // Predicated region
        $region29: #{tpu_custom_call.1} parent=27 // pred_check
          %p201 = pneg %p99
        $region30: #{tpu_custom_call.1} parent=27 // pred_check_branch
          %203 = sbr.rel (%p201) target = $region32
        $region31: #{tpu_custom_call.1} parent=27 // pred_region
          %s204 = sand.u32 %s16, 1
          %s205 = scalar_lea.sflag [#allocation3], %s204
          %s206 = sand.u32 %s89, 1
          %s207 = smul.addr %s206, 128
          %s208 = scalar_lea.vmem [#allocation7], %s207
          %s209 = smul.u32 2, %s16
          %s211 = ssub.s32 2048, 2048
          %212 = vsyncadd %s205, %s211
          %s213 = smul.addr %s209, 64
          %s214 = scalar_lea.hbm %s3, %s213
          %s215 = sshll.u32 %s208, 4
          %s216 = int_to_ptr.vmem [resolvable:$true] %s215
          %221 = dma.hbm_to_vmem [thread:$0]  %s214, 2048, %s216, %s205, 384, 128, 8
        $region32: #{tpu_custom_call.1} parent=27 // pred_fallthru
          _
        // Predicated region
        $region33: #{tpu_custom_call.1} parent=27 // pred_check
          %p222 = pneg %p125
        $region34: #{tpu_custom_call.1} parent=27 // pred_check_branch
          %224 = sbr.rel (%p222) target = $region36
        $region35: #{tpu_custom_call.1} parent=27 // pred_region
          %s225 = smul.u32 2, %s16
          %p226 = scmp.lt.s32.totalorder %s225, 5
          %s227 = scalar_select %p226, %s225, 5
          %s228 = scalar_lea.vmem %s4, %s227
          %s229 = smul.u32 2, %s16
        $region36: #{tpu_custom_call.1} parent=27 // pred_fallthru
          _
      $region28: #{tpu_custom_call.1} parent=5 // pred_fallthru
        _
      %p230 = scmp.le.s32.totalorder 1, %s16
      %p231 = scmp.lt.s32.totalorder %s16, 4
      %p232 = pnand %p230, %p231
      %p233 = pneg %p232
      // Predicated region
      $region37: #{tpu_custom_call.1} parent=5 // pred_check
        _
      $region38: #{tpu_custom_call.1} parent=5 // pred_check_branch
        %235 = sbr.rel (%p232) target = $region40
      $region39: #{tpu_custom_call.1} parent=5 // pred_region
        %s236 = ssub.s32 %s16, 1
        // Predicated region
        $region41: #{tpu_custom_call.1} parent=39 // pred_check
          %p237 = pneg %p37
        $region42: #{tpu_custom_call.1} parent=39 // pred_check_branch
          %239 = sbr.rel (%p237) target = $region44
        $region43: #{tpu_custom_call.1} parent=39 // pred_region
          %240 = dma.done [#allocation3], 128
        $region44: #{tpu_custom_call.1} parent=39 // pred_fallthru
          _
        // Predicated region
        $region45: #{tpu_custom_call.1} parent=39 // pred_check
          %p241 = pneg %p58
        $region46: #{tpu_custom_call.1} parent=39 // pred_check_branch
          %243 = sbr.rel (%p241) target = $region48
        $region47: #{tpu_custom_call.1} parent=39 // pred_region
          %244 = dma.done [#allocation6], 64
        $region48: #{tpu_custom_call.1} parent=39 // pred_fallthru
          _
        %s245 = sand.u32 %s21, 1
        %s246 = scalar_lea.sflag [#allocation3], %s245
        %s247 = sand.u32 %s92, 1
        %s248 = smul.addr %s247, 128
        %s249 = scalar_lea.vmem [#allocation7], %s248
        // Predicated region
        $region49: #{tpu_custom_call.1} parent=39 // pred_check
          %p250 = pneg %p105
        $region50: #{tpu_custom_call.1} parent=39 // pred_check_branch
          %252 = sbr.rel (%p250) target = $region52
        $region51: #{tpu_custom_call.1} parent=39 // pred_region
          %253 = dma.done %s246, 2048
        $region52: #{tpu_custom_call.1} parent=39 // pred_fallthru
          _
        %p254 = pneg %p37
        %p255 = pneg %p34
        %p256 = pneg %p58
        %p257 = pneg %p55
        %p258 = pneg %p79
        %p259 = pneg %p76
        %s260 = sand.u32 %s21, 1
        %s261 = scalar_lea.sflag [#allocation3], %s260
        %s262 = sand.u32 %s92, 1
        %s263 = smul.addr %s262, 128
        %s264 = scalar_lea.vmem [#allocation7], %s263
        %p265 = pneg %p105
        %p266 = pneg %p102
        %s267 = smul.u32 2, %s21
        %p268 = scmp.lt.s32.totalorder %s267, 5
        %s269 = scalar_select %p268, %s267, 5
        %s270 = scalar_lea.vmem %s4, %s269
        %p271 = pneg %p131
        %p272 = pneg %p128
        %p273 = pneg %p157
        %p274 = pneg %p154
        %s275 = sand.u32 %s144, 1
        %s276 = scalar_lea.sflag [#allocation4], %s275
        %s277 = sand.u32 %s144, 1
        %s278 = smul.addr %s277, 16
        %s279 = scalar_lea.vmem [#allocation8], %s278
        %s280 = smul.u32 2, %s21
        %s281 = smul.u32 2, %s21
        %p282 = scmp.lt.s32.totalorder %s281, 5
        %s283 = scalar_select %p282, %s281, 5
        %s284 = scalar_lea.vmem %s4, %s283
        %s285 = smul.u32 2, %s21
        %s286 = smul.u32 2, %s21
        %v287 = vld [vmem:[#allocation2] sm:$0xff]
        %v288 = vld [vmem:[#allocation5] sm:$0xf]
        %v289 = vunpack.c.l.bf16 %v288
        %v290 = vld [vmem:[%s2] sm:$0x1]
        %v292 = vlaneseq
        %v293 = vshrl.u32 %v292, 7
        %v294 = vsub.s32 0, %v293
        %v295 = vrot.slane %v290, %v294
        %vm297 = vcmask 64512
        %v299 = vsel %vm297, %v287, 0
        %301 = vmatprep.subr.mxu0 0.0
        %302 = vmatpush1.msra.mxu0 %v289
        %303 = vmatprep.subr.mxu0 0.0
        %304 = vmatpush1.msra.mxu0 0.0
        %305 = vmatprep.subr.mxu0 0.0
        %306 = vmatpush1.msra.mxu0 0.0
        %307 = vmatprep.subr.mxu0 0.0
        %308 = vmatpush1.msra.mxu0 0.0
        %309 = vmatprep.subr.mxu0 0.0
        %310 = vmatpush1.msra.mxu0 0.0
        %311 = vmatprep.subr.mxu0 0.0
        %312 = vmatpush1.msra.mxu0 0.0
        %313 = vmatprep.subr.mxu0 0.0
        %314 = vmatpush1.msra.mxu0 0.0
        %315 = vmatprep.subr.mxu0 0.0
        %316 = vmatpush1.msra.mxu0 0.0
        %317 = vmatprep.subr.mxu0 0.0
        %318 = vmatpush1.msra.mxu0 0.0
        %319 = vmatprep.subr.mxu0 0.0
        %320 = vmatpush1.msra.mxu0 0.0
        %321 = vmatprep.subr.mxu0 0.0
        %322 = vmatpush1.msra.mxu0 0.0
        %323 = vmatprep.subr.mxu0 0.0
        %324 = vmatpush1.msra.mxu0 0.0
        %325 = vmatprep.subr.mxu0 0.0
        %326 = vmatpush1.msra.mxu0 0.0
        %327 = vmatprep.subr.mxu0 0.0
        %328 = vmatpush1.msra.mxu0 0.0
        %329 = vmatprep.subr.mxu0 0.0
        %330 = vmatpush1.msra.mxu0 0.0
        %331 = vmatprep.subr.mxu0 0.0
        %332 = vmatpush1.msra.mxu0 0.0
        %333 = vmatprep.subr.mxu0 0.0
        %334 = vmatpush1.msra.mxu0 0.0
        %335 = vmatprep.subr.mxu0 0.0
        %336 = vmatpush1.msra.mxu0 0.0
        %337 = vmatprep.subr.mxu0 0.0
        %338 = vmatpush1.msra.mxu0 0.0
        %339 = vmatprep.subr.mxu0 0.0
        %340 = vmatpush1.msra.mxu0 0.0
        %341 = vmatprep.subr.mxu0 0.0
        %342 = vmatpush1.msra.mxu0 0.0
        %343 = vmatprep.subr.mxu0 0.0
        %344 = vmatpush1.msra.mxu0 0.0
        %345 = vmatprep.subr.mxu0 0.0
        %346 = vmatpush1.msra.mxu0 0.0
        %347 = vmatprep.subr.mxu0 0.0
        %348 = vmatpush1.msra.mxu0 0.0
        %349 = vmatprep.subr.mxu0 0.0
        %350 = vmatpush1.msra.mxu0 0.0
        %351 = vmatprep.subr.mxu0 0.0
        %352 = vmatpush1.msra.mxu0 0.0
        %353 = vmatprep.subr.mxu0 0.0
        %354 = vmatpush1.msra.mxu0 0.0
        %355 = vmatprep.subr.mxu0 0.0
        %356 = vmatpush1.msra.mxu0 0.0
        %357 = vmatprep.subr.mxu0 0.0
        %358 = vmatpush1.msra.mxu0 0.0
        %359 = vmatprep.subr.mxu0 0.0
        %360 = vmatpush1.msra.mxu0 0.0
        %361 = vmatprep.subr.mxu0 0.0
        %362 = vmatpush1.msra.mxu0 0.0
        %363 = vmatprep.subr.mxu0 0.0
        %364 = vmatpush1.msra.mxu0 0.0
        %365 = vmatprep.mubr.f32.mxu0 0.0
        %366 = vmatmul.mubr.f32.gmra.mrb[0].mxu0 %v299
        %v367 = vpop.f32.mrb[0].mxu0
        %v368 = vadd.f32 %v295, %v367
        %v369 = vpop.f32.mrb[0].mxu0
        %370 = vdwg.mxu0
        %v371 = vmax.f32 %v368, 0.0
        %v372 = vld [vmem:[%s249] sm:$0xff]
        %v373 = vld [vmem:[%s249 + $0x8] sm:$0xff]
        %v374 = vld [vmem:[%s249 + $0x10] sm:$0xff]
        %v375 = vld [vmem:[%s249 + $0x18] sm:$0xff]
        %v376 = vld [vmem:[%s249 + $0x20] sm:$0xff]
        %v377 = vld [vmem:[%s249 + $0x28] sm:$0xff]
        %v378 = vld [vmem:[%s249 + $0x30] sm:$0xff]
        %v379 = vld [vmem:[%s249 + $0x38] sm:$0xff]
        %v380 = vld [vmem:[%s249 + $0x40] sm:$0xff]
        %v381 = vld [vmem:[%s249 + $0x48] sm:$0xff]
        %v382 = vld [vmem:[%s249 + $0x50] sm:$0xff]
        %v383 = vld [vmem:[%s249 + $0x58] sm:$0xff]
        %v384 = vld [vmem:[%s249 + $0x60] sm:$0xff]
        %v385 = vld [vmem:[%s249 + $0x68] sm:$0xff]
        %v386 = vld [vmem:[%s249 + $0x70] sm:$0xff]
        %v387 = vld [vmem:[%s249 + $0x78] sm:$0xff]
        %v388 = vunpack.c.l.bf16 %v372
        %v389 = vunpack.c.h.bf16 %v372
        %v390 = vunpack.c.l.bf16 %v373
        %v391 = vunpack.c.h.bf16 %v373
        %v392 = vunpack.c.l.bf16 %v374
        %v393 = vunpack.c.h.bf16 %v374
        %v394 = vunpack.c.l.bf16 %v375
        %v395 = vunpack.c.h.bf16 %v375
        %v396 = vunpack.c.l.bf16 %v376
        %v397 = vunpack.c.h.bf16 %v376
        %v398 = vunpack.c.l.bf16 %v377
        %v399 = vunpack.c.h.bf16 %v377
        %v400 = vunpack.c.l.bf16 %v378
        %v401 = vunpack.c.h.bf16 %v378
        %v402 = vunpack.c.l.bf16 %v379
        %v403 = vunpack.c.h.bf16 %v379
        %v404 = vunpack.c.l.bf16 %v380
        %v405 = vunpack.c.h.bf16 %v380
        %v406 = vunpack.c.l.bf16 %v381
        %v407 = vunpack.c.h.bf16 %v381
        %v408 = vunpack.c.l.bf16 %v382
        %v409 = vunpack.c.h.bf16 %v382
        %v410 = vunpack.c.l.bf16 %v383
        %v411 = vunpack.c.h.bf16 %v383
        %v412 = vunpack.c.l.bf16 %v384
        %v413 = vunpack.c.h.bf16 %v384
        %v414 = vunpack.c.l.bf16 %v385
        %v415 = vunpack.c.h.bf16 %v385
        %v416 = vunpack.c.l.bf16 %v386
        %v417 = vunpack.c.h.bf16 %v386
        %v418 = vunpack.c.l.bf16 %v387
        %v419 = vunpack.c.h.bf16 %v387
        %v420 = vld [vmem:[%s284] sm:$0x3]
        %v422 = vlaneseq
        %v423 = vshrl.u32 %v422, 7
        %v424 = vsub.s32 0, %v423
        %v425 = vrot.slane %v420, %v424
        %v426 = vlaneseq
        %v427 = vshrl.u32 %v426, 7
        %v428 = vsub.s32 1, %v427
        %v429 = vrot.slane %v420, %v428
        %432 = vmatprep.subr.mxu0 %v389
        %433 = vmatpush1.msra.mxu0 %v388
        %434 = vmatprep.subr.mxu0 %v391
        %435 = vmatpush1.msra.mxu0 %v390
        %436 = vmatprep.subr.mxu0 %v393
        %437 = vmatpush1.msra.mxu0 %v392
        %438 = vmatprep.subr.mxu0 %v395
        %439 = vmatpush1.msra.mxu0 %v394
        %440 = vmatprep.subr.mxu0 %v397
        %441 = vmatpush1.msra.mxu0 %v396
        %442 = vmatprep.subr.mxu0 %v399
        %443 = vmatpush1.msra.mxu0 %v398
        %444 = vmatprep.subr.mxu0 %v401
        %445 = vmatpush1.msra.mxu0 %v400
        %446 = vmatprep.subr.mxu0 %v403
        %447 = vmatpush1.msra.mxu0 %v402
        %448 = vmatprep.subr.mxu0 %v405
        %449 = vmatpush1.msra.mxu0 %v404
        %450 = vmatprep.subr.mxu0 %v407
        %451 = vmatpush1.msra.mxu0 %v406
        %452 = vmatprep.subr.mxu0 %v409
        %453 = vmatpush1.msra.mxu0 %v408
        %454 = vmatprep.subr.mxu0 %v411
        %455 = vmatpush1.msra.mxu0 %v410
        %456 = vmatprep.subr.mxu0 %v413
        %457 = vmatpush1.msra.mxu0 %v412
        %458 = vmatprep.subr.mxu0 %v415
        %459 = vmatpush1.msra.mxu0 %v414
        %460 = vmatprep.subr.mxu0 %v417
        %461 = vmatpush1.msra.mxu0 %v416
        %462 = vmatprep.subr.mxu0 %v419
        %463 = vmatpush1.msra.mxu0 %v418
        %464 = vmatprep.subr.mxu0 0.0
        %465 = vmatpush1.msra.mxu0 0.0
        %466 = vmatprep.subr.mxu0 0.0
        %467 = vmatpush1.msra.mxu0 0.0
        %468 = vmatprep.subr.mxu0 0.0
        %469 = vmatpush1.msra.mxu0 0.0
        %470 = vmatprep.subr.mxu0 0.0
        %471 = vmatpush1.msra.mxu0 0.0
        %472 = vmatprep.subr.mxu0 0.0
        %473 = vmatpush1.msra.mxu0 0.0
        %474 = vmatprep.subr.mxu0 0.0
        %475 = vmatpush1.msra.mxu0 0.0
        %476 = vmatprep.subr.mxu0 0.0
        %477 = vmatpush1.msra.mxu0 0.0
        %478 = vmatprep.subr.mxu0 0.0
        %479 = vmatpush1.msra.mxu0 0.0
        %480 = vmatprep.subr.mxu0 0.0
        %481 = vmatpush1.msra.mxu0 0.0
        %482 = vmatprep.subr.mxu0 0.0
        %483 = vmatpush1.msra.mxu0 0.0
        %484 = vmatprep.subr.mxu0 0.0
        %485 = vmatpush1.msra.mxu0 0.0
        %486 = vmatprep.subr.mxu0 0.0
        %487 = vmatpush1.msra.mxu0 0.0
        %488 = vmatprep.subr.mxu0 0.0
        %489 = vmatpush1.msra.mxu0 0.0
        %490 = vmatprep.subr.mxu0 0.0
        %491 = vmatpush1.msra.mxu0 0.0
        %492 = vmatprep.subr.mxu0 0.0
        %493 = vmatpush1.msra.mxu0 0.0
        %494 = vmatprep.subr.mxu0 0.0
        %495 = vmatpush1.msra.mxu0 0.0
        %496 = vmatprep.mubr.f32.mxu0 0.0
        %497 = vmatmul.mubr.f32.gmra.mrb[0].mxu0 %v371
        %v498 = vpop.f32.mrb[0].mxu0
        %v499 = vadd.f32 %v425, %v498
        %v500 = vpop.f32.mrb[0].mxu0
        %v501 = vadd.f32 %v429, %v500
        %502 = vdwg.mxu0
        %v503 = vxor.u32 %v499, 2147483648
        %v504 = vxor.u32 %v501, 2147483648
        %v505 = vmul.f32 %v503, 1.442695
        %v506 = vpow.pop %v505
        %v507 = vmul.f32 %v504, 1.442695
        %v508 = vpow.pop %v507
        %v509 = vadd.f32 %v506, 1.0
        %v510 = vadd.f32 %v508, 1.0
        %v511 = vrcp.pop %v509
        %v512 = vmul.f32 1.0, %v511
        %v513 = vrcp.pop %v510
        %v514 = vmul.f32 1.0, %v513
        %515 = vst [vmem:[%s279] sm:$0xff] %v512
        %516 = vst [vmem:[%s279 + $0x8] sm:$0xff] %v514
        %s517 = sand.u32 %s144, 1
        %s518 = scalar_lea.sflag [#allocation4], %s517
        %s519 = sand.u32 %s144, 1
        %s520 = smul.addr %s519, 16
        %s521 = scalar_lea.vmem [#allocation8], %s520
        // Predicated region
        $region53: #{tpu_custom_call.1} parent=39 // pred_check
          %p522 = pneg %p154
        $region54: #{tpu_custom_call.1} parent=39 // pred_check_branch
          %524 = sbr.rel (%p522) target = $region56
        $region55: #{tpu_custom_call.1} parent=39 // pred_region
          %s525 = smul.u32 2, %s21
          %s527 = ssub.s32 256, 256
          %528 = vsyncadd %s518, %s527
          %s529 = smul.addr %s525, 128
          %s530 = scalar_lea.hbm %s5, %s529
          %s532 = sshll.u32 %s521, 4
          %s533 = int_to_ptr.vmem [resolvable:$true] %s532
          %535 = dma.vmem_to_hbm [thread:$0]  %s533, 256, %s530, %s518
        $region56: #{tpu_custom_call.1} parent=39 // pred_fallthru
          _
      $region40: #{tpu_custom_call.1} parent=5 // pred_fallthru
        _
      %p536 = scmp.le.s32.totalorder 2, %s16
      // Predicated region
      $region57: #{tpu_custom_call.1} parent=5 // pred_check
        %p537 = pneg %p536
      $region58: #{tpu_custom_call.1} parent=5 // pred_check_branch
        %539 = sbr.rel (%p537) target = $region60
      $region59: #{tpu_custom_call.1} parent=5 // pred_region
        %s540 = ssub.s32 %s16, 2
        // Predicated region
        $region61: #{tpu_custom_call.1} parent=59 // pred_check
          %p541 = pneg %p160
        $region62: #{tpu_custom_call.1} parent=59 // pred_check_branch
          %543 = sbr.rel (%p541) target = $region64
        $region63: #{tpu_custom_call.1} parent=59 // pred_region
          %s544 = sand.u32 %s145, 1
          %s545 = scalar_lea.sflag [#allocation4], %s544
          %s546 = sand.u32 %s145, 1
          %s547 = smul.addr %s546, 16
          %s548 = scalar_lea.vmem [#allocation8], %s547
          %549 = dma.done %s545, 256
        $region64: #{tpu_custom_call.1} parent=59 // pred_fallthru
          _
      $region60: #{tpu_custom_call.1} parent=5 // pred_fallthru
        _
    $region6: #{tpu_custom_call.1} parent=1 // loop_footer
      %s20 = sadd.s32 1, %s16
    $region7: #{tpu_custom_call.1} parent=1 // loop_footer_branch
      %15 = sbr.rel target = $region3
    $region8: #{tpu_custom_call.1} parent=1 // loop_exit
      _
    %550 = vsyncpa [#allocation3], 1
    %s551 = scalar_lea.sflag [#allocation3], 1
    %552 = vsyncpa %s551, 1
    %553 = vsyncpa [#allocation6], 1
    %554 = vsyncpa [#allocation4], 1
    %s555 = scalar_lea.sflag [#allocation4], 1
    %556 = vsyncpa %s555, 1

</llo_original>
